<compile_context>
chip_gen: v7x
topology: tpu7x:2x2x1
jax: 0.10.0
libtpu: 0.0.40
codegen_flags: <defaults>
</compile_context>

<pallas_src>
import jax
import jax.numpy as jnp
from jax.experimental import pallas as pl
from jax.experimental.pallas import tpu as pltpu


def _dlw_kernel(x_ref, w1_ref, b1_ref, w2_ref, b2_ref, o_ref):
    # x_ref : (TM, D4)  VMEM   rows of embedded input (streamed)
    # w1_ref: (D4, H)   VMEM   first Linear weight (resident, constant index map)
    # b1_ref: (1, H)    VMEM
    # w2_ref: (1, H)    VMEM   second Linear weight as a row vector
    # b2_ref: (1,)      SMEM   second Linear bias (scalar)
    # o_ref : (1, TM)   VMEM   lane-dense sigmoid scores for this row tile
    x = x_ref[...]
    # Linear(4*input_dim, hidden) + Tanh, f32 accumulation on the MXU.
    h = jnp.tanh(
        jnp.dot(x, w1_ref[...], preferred_element_type=jnp.float32) + b1_ref[...]
    )  # (TM, H) f32
    # Linear(hidden, 1): elementwise multiply by the w2 row, then reduce over H.
    # Transpose first so the reduction runs over sublanes and the result is
    # already lane-dense (1, TM); the transpose uses the idle XLU slot and the
    # reduce/transcendentals stay off the MXU / store path.
    hw_t = jnp.transpose(h * w2_ref[...])                     # (H, TM)
    logit = jnp.sum(hw_t, axis=0, keepdims=True) + b2_ref[0]  # (1, TM)
    o_ref[...] = jax.nn.sigmoid(logit).astype(o_ref.dtype)


def dynamic_loss_weight_forward(x, w1, b1, w2_row, b2, *, tile_m=1024,
                                use_bf16_matmul=False):
    """One shared weight-layer applied to x; returns the two (identical) scores.

    x      : (N, 4*input_dim) float32
    w1     : (4*input_dim, hidden_dim)
    b1     : (hidden_dim,)
    w2_row : (hidden_dim,)   -- weight of Linear(hidden_dim, 1), flattened
    b2     : scalar
    """
    N, D4 = x.shape
    H = w1.shape[1]

    # Clamp tile_m: multiple of 128 (lane-dense output, MXU-friendly M), but no
    # bigger than N rounded up to 128 (avoid silly padding for tiny inputs).
    tile_m = max(128, min(tile_m, pl.cdiv(N, 128) * 128))
    grid_m = pl.cdiv(N, tile_m)
    n_pad = grid_m * tile_m

    if use_bf16_matmul:
        x_in = x.astype(jnp.bfloat16)
        w1_in = w1.astype(jnp.bfloat16)
    else:
        x_in = x
        w1_in = w1

    if n_pad != N:
        # TODO(synk): a masked last tile would avoid this extra HBM copy of x.
        x_in = jnp.pad(x_in, ((0, n_pad - N), (0, 0)))

    b1_2d = b1.reshape(1, H).astype(jnp.float32)
    w2_2d = w2_row.reshape(1, H).astype(jnp.float32)
    b2_1d = jnp.asarray(b2, jnp.float32).reshape(1)

    out = pl.pallas_call(
        _dlw_kernel,
        out_shape=jax.ShapeDtypeStruct((grid_m, 1, tile_m), jnp.float32),
        grid_spec=pltpu.PrefetchScalarGridSpec(
            num_scalar_prefetch=0,
            grid=(grid_m,),
            in_specs=[
                pl.BlockSpec((tile_m, D4), lambda i: (i, 0)),       # streamed x rows
                pl.BlockSpec((D4, H), lambda i: (0, 0)),            # resident weights
                pl.BlockSpec((1, H), lambda i: (0, 0)),
                pl.BlockSpec((1, H), lambda i: (0, 0)),
                pl.BlockSpec(memory_space=pltpu.MemorySpace.SMEM),  # scalar bias
            ],
            # Lane-dense output slab: block (1, tile_m), leading dim squeezed.
            out_specs=pl.BlockSpec((None, 1, tile_m), lambda i: (i, 0, 0)),
        ),
        compiler_params=pltpu.CompilerParams(
            dimension_semantics=("parallel",),   # grid steps shard across TCs (v7x)
        ),
    )(x_in, w1_in, b1_2d, w2_2d, b2_1d)

    score = out.reshape(-1)[:N]  # lane-dense slabs -> (N,), drop padded rows
    # clones(lambda: weight_layer, 2) shares one module -> two identical scores.
    return [score, score]


if __name__ == "__main__":
    # Small shapes consistent with the module: input_dim=32 -> in_features=128,
    # hidden_dim=32.
    input_dim = 32
    hidden_dim = 32
    D4 = 4 * input_dim

    key = jax.random.PRNGKey(0)
    kx, kw1, kb1, kw2, kb2, kx2 = jax.random.split(key, 6)

    # Deterministic parameter init (mimics nn.Linear uniform(-1/sqrt(fan_in), ...)).
    bound1 = 1.0 / (D4 ** 0.5)
    bound2 = 1.0 / (hidden_dim ** 0.5)
    w1 = jax.random.uniform(kw1, (D4, hidden_dim), jnp.float32, -bound1, bound1)
    b1 = jax.random.uniform(kb1, (hidden_dim,), jnp.float32, -bound1, bound1)
    w2_row = jax.random.uniform(kw2, (hidden_dim,), jnp.float32, -bound2, bound2)
    b2 = jax.random.uniform(kb2, (), jnp.float32, -bound2, bound2)

    def ref_forward(xv):
        h = jnp.tanh(xv @ w1 + b1)
        return jax.nn.sigmoid(h @ w2_row + b2)

    # Case 1: tiny batch (module-scale shapes), single grid step after clamping.
    x_small = jax.random.normal(kx, (8, D4), jnp.float32)
    s0, s1 = dynamic_loss_weight_forward(x_small, w1, b1, w2_row, b2)
    s0 = jax.block_until_ready(s0)
    s1 = jax.block_until_ready(s1)
    ref_small = ref_forward(x_small)
    assert s0.shape == (8,) and s1.shape == (8,)
    assert jnp.allclose(s0, ref_small, atol=1e-5)
    assert jnp.allclose(s1, ref_small, atol=1e-5)

    # Case 2: ragged N with a multi-step grid (exercises padding + lane-dense
    # multi-block output + grid index maps).
    x_big = jax.random.normal(kx2, (300, D4), jnp.float32)
    t0, _ = dynamic_loss_weight_forward(x_big, w1, b1, w2_row, b2, tile_m=128)
    t0 = jax.block_until_ready(t0)
    ref_big = ref_forward(x_big)
    assert t0.shape == (300,)
    assert jnp.allclose(t0, ref_big, atol=1e-5)

    # Case 3: optional bf16 matmul inputs (halves HBM traffic of the x stream).
    u0, _ = dynamic_loss_weight_forward(x_big, w1, b1, w2_row, b2, tile_m=128,
                                        use_bf16_matmul=True)
    u0 = jax.block_until_ready(u0)
    assert float(jnp.max(jnp.abs(u0 - ref_big))) < 5e-2

    print("KERNEL_OK")
</pallas_src>

<mosaic_0001>
module attributes {stable_mosaic.version = 11 : i64} {
  func.func @_dlw_kernel(%arg0: i32, %arg1: memref<128x128xf32, #tpu.memory_space<vmem>>, %arg2: memref<128x32xf32, #tpu.memory_space<vmem>>, %arg3: memref<1x32xf32, #tpu.memory_space<vmem>>, %arg4: memref<1x32xf32, #tpu.memory_space<vmem>>, %arg5: memref<1xf32, #tpu.memory_space<smem>>, %arg6: memref<1x1x128xf32, #tpu.memory_space<vmem>>) attributes {dimension_semantics = [#tpu.dimension_semantics<parallel>], iteration_bounds = array<i64: 1>, scalar_prefetch = 0 : i64, scratch_operands = 0 : i64, tpu.core_type = #tpu.core_type<tc>, window_params = [{transform_indices = @transform_0, window_bounds = array<i64: 128, 128>}, {pipeline_mode = #tpu.pipeline_mode<synchronous>, transform_indices = @transform_1, window_bounds = array<i64: 128, 32>}, {pipeline_mode = #tpu.pipeline_mode<synchronous>, transform_indices = @transform_2, window_bounds = array<i64: 1, 32>}, {pipeline_mode = #tpu.pipeline_mode<synchronous>, transform_indices = @transform_3, window_bounds = array<i64: 1, 32>}, {transform_indices = @transform_4, window_bounds = array<i64: 1>}, {transform_indices = @transform_5, window_bounds = array<i64: 1, 1, 128>}]} {
    %c0 = arith.constant 0 : index
    %c0_0 = arith.constant 0 : index
    %0 = vector.load %arg1[%c0, %c0_0] : memref<128x128xf32, #tpu.memory_space<vmem>>, vector<128x128xf32>
    %c0_1 = arith.constant 0 : index
    %c0_2 = arith.constant 0 : index
    %1 = vector.load %arg2[%c0_1, %c0_2] : memref<128x32xf32, #tpu.memory_space<vmem>>, vector<128x32xf32>
    %cst = arith.constant dense<0.000000e+00> : vector<128x32xf32>
    %2 = tpu.matmul %0, %1, %cst {dimension_numbers = #tpu.dot_dimension_numbers<[1], [0], [0], [1], [0, 0, 1, 1], [], []>} : vector<128x128xf32>, vector<128x32xf32>, vector<128x32xf32> -> vector<128x32xf32>
    %c0_3 = arith.constant 0 : index
    %c0_4 = arith.constant 0 : index
    %3 = vector.load %arg3[%c0_3, %c0_4] : memref<1x32xf32, #tpu.memory_space<vmem>>, vector<1x32xf32>
    %4 = vector.broadcast %3 : vector<1x32xf32> to vector<128x32xf32>
    %5 = arith.addf %2, %4 : vector<128x32xf32>
    %6 = math.tanh %5 : vector<128x32xf32>
    %c0_5 = arith.constant 0 : index
    %c0_6 = arith.constant 0 : index
    %7 = vector.load %arg4[%c0_5, %c0_6] : memref<1x32xf32, #tpu.memory_space<vmem>>, vector<1x32xf32>
    %8 = vector.broadcast %7 : vector<1x32xf32> to vector<128x32xf32>
    %9 = arith.mulf %6, %8 : vector<128x32xf32>
    %10 = tpu.transpose %9, [1, 0] : vector<128x32xf32> -> vector<32x128xf32>
    %cst_7 = arith.constant dense<0.000000e+00> : vector<128xf32>
    %11 = vector.multi_reduction <add>, %10, %cst_7 [0] : vector<32x128xf32> to vector<128xf32>
    %12 = vector.shape_cast %11 : vector<128xf32> to vector<1x128xf32>
    %c0_8 = arith.constant 0 : index
    %13 = memref.load %arg5[%c0_8] : memref<1xf32, #tpu.memory_space<smem>>
    %14 = vector.broadcast %13 : f32 to vector<1x128xf32>
    %15 = arith.addf %12, %14 : vector<1x128xf32>
    %16 = arith.negf %15 : vector<1x128xf32>
    %17 = math.exp %16 : vector<1x128xf32>
    %cst_9 = arith.constant 1.000000e+00 : f32
    %18 = vector.broadcast %cst_9 : f32 to vector<1x128xf32>
    %19 = arith.addf %18, %17 : vector<1x128xf32>
    %20 = arith.divf %18, %19 : vector<1x128xf32>
    %c0_10 = arith.constant 0 : index
    %c0_11 = arith.constant 0 : index
    %c0_12 = arith.constant 0 : index
    %21 = vector.load %arg6[%c0_10, %c0_11, %c0_12] : memref<1x1x128xf32, #tpu.memory_space<vmem>>, vector<1x1x128xf32>
    %22 = vector.shape_cast %21 : vector<1x1x128xf32> to vector<1x128xf32>
    %23 = vector.shape_cast %20 : vector<1x128xf32> to vector<1x1x128xf32>
    tpu.vector_store %arg6[%c0_10, %c0_11, %c0_12], %23 {strides = array<i32>} : memref<1x1x128xf32, #tpu.memory_space<vmem>>, vector<1x1x128xf32>,
    return
  }
  func.func @transform_0(%arg0: i32) -> (i32, i32) {
    %c0_i32 = arith.constant 0 : i32
    %c0_i32_0 = arith.constant 0 : i32
    return %arg0, %c0_i32 : i32, i32
  }
  func.func @transform_1(%arg0: i32) -> (i32, i32) {
    %c0_i32 = arith.constant 0 : i32
    %c0_i32_0 = arith.constant 0 : i32
    %c0_i32_1 = arith.constant 0 : i32
    return %c0_i32, %c0_i32_0 : i32, i32
  }
  func.func @transform_2(%arg0: i32) -> (i32, i32) {
    %c0_i32 = arith.constant 0 : i32
    %c0_i32_0 = arith.constant 0 : i32
    %c0_i32_1 = arith.constant 0 : i32
    return %c0_i32, %c0_i32_0 : i32, i32
  }
  func.func @transform_3(%arg0: i32) -> (i32, i32) {
    %c0_i32 = arith.constant 0 : i32
    %c0_i32_0 = arith.constant 0 : i32
    %c0_i32_1 = arith.constant 0 : i32
    return %c0_i32, %c0_i32_0 : i32, i32
  }
  func.func @transform_4(%arg0: i32) -> i32 {
    %c0_i32 = arith.constant 0 : i32
    %c0_i32_0 = arith.constant 0 : i32
    return %c0_i32 : i32
  }
  func.func @transform_5(%arg0: i32) -> (i32, i32, i32) {
    %c0_i32 = arith.constant 0 : i32
    %c0_i32_0 = arith.constant 0 : i32
    %c0_i32_1 = arith.constant 0 : i32
    return %arg0, %c0_i32, %c0_i32_0 : i32, i32, i32
  }
}

</mosaic_0001>

<llo_original>
// kernel: tpu_custom_call.1
$region0: #{tpu_custom_call.1}
  #allocation0 [shape = 'u32[]', space=smem, size = 0x4, offset = 0x4, fixed_abs, tag = 'smem constant byte address 0x4 - core index']
  #allocation1 [shape = 'u32[144,128]{1,0:T(1,128)}', space=vmem, size = 0x12000, scoped, tag = 'internal scratch']
  #allocation2 [shape = 'f32[1]{0:T(128)S(6)}', space=smem, size = 0x200, scoped, tag = 'scoped memory for tpu_custom_call.1']
  %s0 = inlined_call_operand.vmem [shape: f32[128,128], index: 0, kind: input, shape index: {}]
  %s1 = inlined_call_operand.vmem [shape: f32[128,32], index: 1, kind: input, shape index: {}]
  %s2 = inlined_call_operand.vmem [shape: f32[1,32], index: 2, kind: input, shape index: {}]
  %s3 = inlined_call_operand.vmem [shape: f32[1,32], index: 3, kind: input, shape index: {}]
  %s4 = inlined_call_operand.<no memory space> [shape: f32[1], index: 4, kind: input, shape index: {}]
  %s5 = inlined_call_operand.hbm [shape: f32[1,1,128], index: 5, kind: output, shape index: {}]
  %s6 = sld [smem:[#allocation0]]
  $region30: #{tpu_custom_call.1} parent=0
    _
  %s8 = ssub.s32 1, %s6
  %s9 = scalar_select 0, %s8, %s6
  %10 = sst [smem:[#allocation2]] %s4
  $region1: #{tpu_custom_call.1} parent=0
    #allocation3 [shape = 'u8[512]{0}', space=vmem, size = 0x400, scoped, tag = 'output window, operand 0, single buffered']
    #allocation4 [shape = 's32[1]{0}', space=sflag, size = 0x4, scoped, tag = 'scoped memory for tpu_custom_call.1']
    %11 = vsyncpa [#allocation4], 0
    // Predicated region
    $region2: #{tpu_custom_call.1} parent=1 // pred_check
      _
    $region3: #{tpu_custom_call.1} parent=1 // pred_check_branch
      %13 = sbr.rel (0) target = $region5
    $region4: #{tpu_custom_call.1} parent=1 // pred_region
      _
    $region5: #{tpu_custom_call.1} parent=1 // pred_fallthru
      _
    // Predicated region
    $region6: #{tpu_custom_call.1} parent=1 // pred_check
      _
    $region7: #{tpu_custom_call.1} parent=1 // pred_check_branch
      %15 = sbr.rel (0) target = $region9
    $region8: #{tpu_custom_call.1} parent=1 // pred_region
      _
    $region9: #{tpu_custom_call.1} parent=1 // pred_fallthru
      _
    // Predicated region
    $region10: #{tpu_custom_call.1} parent=1 // pred_check
      _
    $region11: #{tpu_custom_call.1} parent=1 // pred_check_branch
      %17 = sbr.rel (0) target = $region13
    $region12: #{tpu_custom_call.1} parent=1 // pred_region
      _
    $region13: #{tpu_custom_call.1} parent=1 // pred_fallthru
      _
    // Predicated region
    $region14: #{tpu_custom_call.1} parent=1 // pred_check
      _
    $region15: #{tpu_custom_call.1} parent=1 // pred_check_branch
      %19 = sbr.rel (0) target = $region17
    $region16: #{tpu_custom_call.1} parent=1 // pred_region
      _
    $region17: #{tpu_custom_call.1} parent=1 // pred_fallthru
      _
    // Predicated region
    $region18: #{tpu_custom_call.1} parent=1 // pred_check
      _
    $region19: #{tpu_custom_call.1} parent=1 // pred_check_branch
      %21 = sbr.rel (0) target = $region21
    $region20: #{tpu_custom_call.1} parent=1 // pred_region
      _
    $region21: #{tpu_custom_call.1} parent=1 // pred_fallthru
      _
    %v22 = vld [vmem:[%s0] sm:$0xff]
    %v23 = vld [vmem:[%s0 + $0x8] sm:$0xff]
    %v24 = vld [vmem:[%s0 + $0x10] sm:$0xff]
    %v25 = vld [vmem:[%s0 + $0x18] sm:$0xff]
    %v26 = vld [vmem:[%s0 + $0x20] sm:$0xff]
    %v27 = vld [vmem:[%s0 + $0x28] sm:$0xff]
    %v28 = vld [vmem:[%s0 + $0x30] sm:$0xff]
    %v29 = vld [vmem:[%s0 + $0x38] sm:$0xff]
    %v30 = vld [vmem:[%s0 + $0x40] sm:$0xff]
    %v31 = vld [vmem:[%s0 + $0x48] sm:$0xff]
    %v32 = vld [vmem:[%s0 + $0x50] sm:$0xff]
    %v33 = vld [vmem:[%s0 + $0x58] sm:$0xff]
    %v34 = vld [vmem:[%s0 + $0x60] sm:$0xff]
    %v35 = vld [vmem:[%s0 + $0x68] sm:$0xff]
    %v36 = vld [vmem:[%s0 + $0x70] sm:$0xff]
    %v37 = vld [vmem:[%s0 + $0x78] sm:$0xff]
    %v38 = vld [vmem:[%s1] sm:$0xff]
    %v39 = vld [vmem:[%s1 + $0x8] sm:$0xff]
    %v40 = vld [vmem:[%s1 + $0x10] sm:$0xff]
    %v41 = vld [vmem:[%s1 + $0x18] sm:$0xff]
    %v42 = vld [vmem:[%s1 + $0x20] sm:$0xff]
    %v43 = vld [vmem:[%s1 + $0x28] sm:$0xff]
    %v44 = vld [vmem:[%s1 + $0x30] sm:$0xff]
    %v45 = vld [vmem:[%s1 + $0x38] sm:$0xff]
    %v46 = vld [vmem:[%s1 + $0x40] sm:$0xff]
    %v47 = vld [vmem:[%s1 + $0x48] sm:$0xff]
    %v48 = vld [vmem:[%s1 + $0x50] sm:$0xff]
    %v49 = vld [vmem:[%s1 + $0x58] sm:$0xff]
    %v50 = vld [vmem:[%s1 + $0x60] sm:$0xff]
    %v51 = vld [vmem:[%s1 + $0x68] sm:$0xff]
    %v52 = vld [vmem:[%s1 + $0x70] sm:$0xff]
    %v53 = vld [vmem:[%s1 + $0x78] sm:$0xff]
    %v54 = vld [vmem:[%s2] sm:$0x1]
    %v56 = vlaneseq
    %v57 = vshrl.u32 %v56, 7
    %v58 = vsub.s32 0, %v57
    %v59 = vrot.slane %v54, %v58
    %61 = vmatprep.subr.mxu0 0.0
    %62 = vmatpush1.msra.mxu0 %v38
    %63 = vmatprep.subr.mxu0 0.0
    %64 = vmatpush1.msra.mxu0 %v39
    %65 = vmatprep.subr.mxu0 0.0
    %66 = vmatpush1.msra.mxu0 %v40
    %67 = vmatprep.subr.mxu0 0.0
    %68 = vmatpush1.msra.mxu0 %v41
    %69 = vmatprep.subr.mxu0 0.0
    %70 = vmatpush1.msra.mxu0 %v42
    %71 = vmatprep.subr.mxu0 0.0
    %72 = vmatpush1.msra.mxu0 %v43
    %73 = vmatprep.subr.mxu0 0.0
    %74 = vmatpush1.msra.mxu0 %v44
    %75 = vmatprep.subr.mxu0 0.0
    %76 = vmatpush1.msra.mxu0 %v45
    %77 = vmatprep.subr.mxu0 0.0
    %78 = vmatpush1.msra.mxu0 %v46
    %79 = vmatprep.subr.mxu0 0.0
    %80 = vmatpush1.msra.mxu0 %v47
    %81 = vmatprep.subr.mxu0 0.0
    %82 = vmatpush1.msra.mxu0 %v48
    %83 = vmatprep.subr.mxu0 0.0
    %84 = vmatpush1.msra.mxu0 %v49
    %85 = vmatprep.subr.mxu0 0.0
    %86 = vmatpush1.msra.mxu0 %v50
    %87 = vmatprep.subr.mxu0 0.0
    %88 = vmatpush1.msra.mxu0 %v51
    %89 = vmatprep.subr.mxu0 0.0
    %90 = vmatpush1.msra.mxu0 %v52
    %91 = vmatprep.subr.mxu0 0.0
    %92 = vmatpush1.msra.mxu0 %v53
    %93 = vmatprep.subr.mxu0 0.0
    %94 = vmatpush1.msra.mxu0 0.0
    %95 = vmatprep.subr.mxu0 0.0
    %96 = vmatpush1.msra.mxu0 0.0
    %97 = vmatprep.subr.mxu0 0.0
    %98 = vmatpush1.msra.mxu0 0.0
    %99 = vmatprep.subr.mxu0 0.0
    %100 = vmatpush1.msra.mxu0 0.0
    %101 = vmatprep.subr.mxu0 0.0
    %102 = vmatpush1.msra.mxu0 0.0
    %103 = vmatprep.subr.mxu0 0.0
    %104 = vmatpush1.msra.mxu0 0.0
    %105 = vmatprep.subr.mxu0 0.0
    %106 = vmatpush1.msra.mxu0 0.0
    %107 = vmatprep.subr.mxu0 0.0
    %108 = vmatpush1.msra.mxu0 0.0
    %109 = vmatprep.subr.mxu0 0.0
    %110 = vmatpush1.msra.mxu0 0.0
    %111 = vmatprep.subr.mxu0 0.0
    %112 = vmatpush1.msra.mxu0 0.0
    %113 = vmatprep.subr.mxu0 0.0
    %114 = vmatpush1.msra.mxu0 0.0
    %115 = vmatprep.subr.mxu0 0.0
    %116 = vmatpush1.msra.mxu0 0.0
    %117 = vmatprep.subr.mxu0 0.0
    %118 = vmatpush1.msra.mxu0 0.0
    %119 = vmatprep.subr.mxu0 0.0
    %120 = vmatpush1.msra.mxu0 0.0
    %121 = vmatprep.subr.mxu0 0.0
    %122 = vmatpush1.msra.mxu0 0.0
    %123 = vmatprep.subr.mxu0 0.0
    %124 = vmatpush1.msra.mxu0 0.0
    %125 = vmatprep.mubr.f32.mxu0 0.0
    %126 = vmatmul.mubr.f32.gmra.mrb[0].mxu0 %v22
    %v127 = vpop.f32.mrb[0].mxu0
    %v128 = vadd.f32 %v59, %v127
    %v129 = vpop.f32.mrb[0].mxu0
    %130 = vmatprep.mubr.f32.mxu0 0.0
    %131 = vmatmul.mubr.f32.gmra.mrb[0].mxu0 %v23
    %v132 = vpop.f32.mrb[0].mxu0
    %v133 = vadd.f32 %v59, %v132
    %v134 = vpop.f32.mrb[0].mxu0
    %135 = vmatprep.mubr.f32.mxu0 0.0
    %136 = vmatmul.mubr.f32.gmra.mrb[0].mxu0 %v24
    %v137 = vpop.f32.mrb[0].mxu0
    %v138 = vadd.f32 %v59, %v137
    %v139 = vpop.f32.mrb[0].mxu0
    %140 = vmatprep.mubr.f32.mxu0 0.0
    %141 = vmatmul.mubr.f32.gmra.mrb[0].mxu0 %v25
    %v142 = vpop.f32.mrb[0].mxu0
    %v143 = vadd.f32 %v59, %v142
    %v144 = vpop.f32.mrb[0].mxu0
    %145 = vmatprep.mubr.f32.mxu0 0.0
    %146 = vmatmul.mubr.f32.gmra.mrb[0].mxu0 %v26
    %v147 = vpop.f32.mrb[0].mxu0
    %v148 = vadd.f32 %v59, %v147
    %v149 = vpop.f32.mrb[0].mxu0
    %150 = vmatprep.mubr.f32.mxu0 0.0
    %151 = vmatmul.mubr.f32.gmra.mrb[0].mxu0 %v27
    %v152 = vpop.f32.mrb[0].mxu0
    %v153 = vadd.f32 %v59, %v152
    %v154 = vpop.f32.mrb[0].mxu0
    %155 = vmatprep.mubr.f32.mxu0 0.0
    %156 = vmatmul.mubr.f32.gmra.mrb[0].mxu0 %v28
    %v157 = vpop.f32.mrb[0].mxu0
    %v158 = vadd.f32 %v59, %v157
    %v159 = vpop.f32.mrb[0].mxu0
    %160 = vmatprep.mubr.f32.mxu0 0.0
    %161 = vmatmul.mubr.f32.gmra.mrb[0].mxu0 %v29
    %v162 = vpop.f32.mrb[0].mxu0
    %v163 = vadd.f32 %v59, %v162
    %v164 = vpop.f32.mrb[0].mxu0
    %165 = vmatprep.mubr.f32.mxu0 0.0
    %166 = vmatmul.mubr.f32.gmra.mrb[0].mxu0 %v30
    %v167 = vpop.f32.mrb[0].mxu0
    %v168 = vadd.f32 %v59, %v167
    %v169 = vpop.f32.mrb[0].mxu0
    %170 = vmatprep.mubr.f32.mxu0 0.0
    %171 = vmatmul.mubr.f32.gmra.mrb[0].mxu0 %v31
    %v172 = vpop.f32.mrb[0].mxu0
    %v173 = vadd.f32 %v59, %v172
    %v174 = vpop.f32.mrb[0].mxu0
    %175 = vmatprep.mubr.f32.mxu0 0.0
    %176 = vmatmul.mubr.f32.gmra.mrb[0].mxu0 %v32
    %v177 = vpop.f32.mrb[0].mxu0
    %v178 = vadd.f32 %v59, %v177
    %v179 = vpop.f32.mrb[0].mxu0
    %180 = vmatprep.mubr.f32.mxu0 0.0
    %181 = vmatmul.mubr.f32.gmra.mrb[0].mxu0 %v33
    %v182 = vpop.f32.mrb[0].mxu0
    %v183 = vadd.f32 %v59, %v182
    %v184 = vpop.f32.mrb[0].mxu0
    %185 = vmatprep.mubr.f32.mxu0 0.0
    %186 = vmatmul.mubr.f32.gmra.mrb[0].mxu0 %v34
    %v187 = vpop.f32.mrb[0].mxu0
    %v188 = vadd.f32 %v59, %v187
    %v189 = vpop.f32.mrb[0].mxu0
    %190 = vmatprep.mubr.f32.mxu0 0.0
    %191 = vmatmul.mubr.f32.gmra.mrb[0].mxu0 %v35
    %v192 = vpop.f32.mrb[0].mxu0
    %v193 = vadd.f32 %v59, %v192
    %v194 = vpop.f32.mrb[0].mxu0
    %195 = vmatprep.mubr.f32.mxu0 0.0
    %196 = vmatmul.mubr.f32.gmra.mrb[0].mxu0 %v36
    %v197 = vpop.f32.mrb[0].mxu0
    %v198 = vadd.f32 %v59, %v197
    %v199 = vpop.f32.mrb[0].mxu0
    %200 = vmatprep.mubr.f32.mxu0 0.0
    %201 = vmatmul.mubr.f32.gmra.mrb[0].mxu0 %v37
    %v202 = vpop.f32.mrb[0].mxu0
    %v203 = vadd.f32 %v59, %v202
    %v204 = vpop.f32.mrb[0].mxu0
    %205 = vdwg.mxu0
    %v206 = vtanh.pop %v128
    %v207 = vtanh.pop %v133
    %v208 = vtanh.pop %v138
    %v209 = vtanh.pop %v143
    %v210 = vtanh.pop %v148
    %v211 = vtanh.pop %v153
    %v212 = vtanh.pop %v158
    %v213 = vtanh.pop %v163
    %v214 = vtanh.pop %v168
    %v215 = vtanh.pop %v173
    %v216 = vtanh.pop %v178
    %v217 = vtanh.pop %v183
    %v218 = vtanh.pop %v188
    %v219 = vtanh.pop %v193
    %v220 = vtanh.pop %v198
    %v221 = vtanh.pop %v203
    %v222 = vld [vmem:[%s3] sm:$0x1]
    %v224 = vlaneseq
    %v225 = vshrl.u32 %v224, 7
    %v226 = vsub.s32 0, %v225
    %v227 = vrot.slane %v222, %v226
    %v229 = vmul.f32 %v206, %v227
    %v230 = vmul.f32 %v207, %v227
    %v231 = vmul.f32 %v208, %v227
    %v232 = vmul.f32 %v209, %v227
    %v233 = vmul.f32 %v210, %v227
    %v234 = vmul.f32 %v211, %v227
    %v235 = vmul.f32 %v212, %v227
    %v236 = vmul.f32 %v213, %v227
    %v237 = vmul.f32 %v214, %v227
    %v238 = vmul.f32 %v215, %v227
    %v239 = vmul.f32 %v216, %v227
    %v240 = vmul.f32 %v217, %v227
    %v241 = vmul.f32 %v218, %v227
    %v242 = vmul.f32 %v219, %v227
    %v243 = vmul.f32 %v220, %v227
    %v244 = vmul.f32 %v221, %v227
    %245 = vxpose.xlu0.b32.start [1/16] %v229, 128
    %246 = vxpose.xlu0.b32.cont [2/16] %v230, 128
    %247 = vxpose.xlu0.b32.cont [3/16] %v231, 128
    %248 = vxpose.xlu0.b32.cont [4/16] %v232, 128
    %249 = vxpose.xlu0.b32.cont [5/16] %v233, 128
    %250 = vxpose.xlu0.b32.cont [6/16] %v234, 128
    %251 = vxpose.xlu0.b32.cont [7/16] %v235, 128
    %252 = vxpose.xlu0.b32.cont [8/16] %v236, 128
    %253 = vxpose.xlu0.b32.cont [9/16] %v237, 128
    %254 = vxpose.xlu0.b32.cont [10/16] %v238, 128
    %255 = vxpose.xlu0.b32.cont [11/16] %v239, 128
    %256 = vxpose.xlu0.b32.cont [12/16] %v240, 128
    %257 = vxpose.xlu0.b32.cont [13/16] %v241, 128
    %258 = vxpose.xlu0.b32.cont [14/16] %v242, 128
    %259 = vxpose.xlu0.b32.cont [15/16] %v243, 128
    %260 = vxpose.xlu0.b32.end [16/16] %v244, 128
    %v261 = vpop.trf.xlu0
    %v262 = vpop.trf.xlu0
    %v263 = vpop.trf.xlu0
    %v264 = vpop.trf.xlu0
    %v265 = vpop.trf.xlu0
    %v266 = vpop.trf.xlu0
    %v267 = vpop.trf.xlu0
    %v268 = vpop.trf.xlu0
    %v269 = vpop.trf.xlu0
    %v270 = vpop.trf.xlu0
    %v271 = vpop.trf.xlu0
    %v272 = vpop.trf.xlu0
    %v273 = vpop.trf.xlu0
    %v274 = vpop.trf.xlu0
    %v275 = vpop.trf.xlu0
    %v276 = vpop.trf.xlu0
    %v277 = vadd.f32 %v261, %v262
    %v278 = vadd.f32 %v277, %v263
    %v279 = vadd.f32 %v278, %v264
    %v280 = vrot.slane %v279, 4
    %v281 = vadd.f32 %v279, %v280
    %v282 = vrot.slane %v281, 2
    %v283 = vadd.f32 %v281, %v282
    %v284 = vrot.slane %v283, 1
    %v285 = vadd.f32 %v283, %v284
    %s286 = sld [smem:[#allocation2]]
    %v287 = vstv %s286
    %v288 = vadd.f32 %v285, %v287
    %v289 = vxor.u32 %v288, 2147483648
    %v290 = vmul.f32 %v289, 1.442695
    %v291 = vpow.pop %v290
    %v292 = vadd.f32 %v291, 1.0
    %v293 = vrcp.pop %v292
    %v294 = vmul.f32 1.0, %v293
    %295 = vst [vmem:[#allocation3] sm:$0x1] %v294
    // Predicated region
    $region22: #{tpu_custom_call.1} parent=1 // pred_check
      _
    $region23: #{tpu_custom_call.1} parent=1 // pred_check_branch
      %297 = sbr.rel (0) target = $region25
    $region24: #{tpu_custom_call.1} parent=1 // pred_region
      %s299 = ssub.s32 16, 16
      %300 = vsyncadd [#allocation4], %s299
      %s302 = sshll.u32 [#allocation3], 4
      %s303 = int_to_ptr.vmem [resolvable:$true] %s302
      %305 = dma.vmem_to_hbm [thread:$0]  %s303, 16, %s5, [#allocation4]
    $region25: #{tpu_custom_call.1} parent=1 // pred_fallthru
      _
    // Predicated region
    $region26: #{tpu_custom_call.1} parent=1 // pred_check
      _
    $region27: #{tpu_custom_call.1} parent=1 // pred_check_branch
      %307 = sbr.rel (0) target = $region29
    $region28: #{tpu_custom_call.1} parent=1 // pred_region
      %308 = dma.done [#allocation4], 16
    $region29: #{tpu_custom_call.1} parent=1 // pred_fallthru
      _
    %309 = vsyncpa [#allocation4], 1

</llo_original>
